<compile_context>
chip_gen: v5e
topology: v5e:2x2
jax: 0.10.0
libtpu: 0.0.40
codegen_flags: <defaults>
</compile_context>

<pallas_src>
import functools
import math

import jax
import jax.numpy as jnp
from jax.experimental import pallas as pl
from jax.experimental.pallas import tpu as pltpu


def _round_up(x, m):
    return ((x + m - 1) // m) * m


# ---------------------------------------------------------------------------
# Kernels
# ---------------------------------------------------------------------------

def _timestep_encoder_kernel(t_ref, freqs_ref, w1s_ref, w1c_ref, b1_ref,
                             w2_ref, b2_ref, out_ref, *, bf16_silu):
    """Fully-resident-weights variant: one batch tile per grid step.

    t_ref:[TM,1] f32, freqs_ref:[1,Hp] f32, w1s/w1c:[Hp,Dp] bf16, b1/b2:[1,Dp] f32,
    w2:[Dp,Dp] bf16, out:[TM,Dp].
    """
    args = t_ref[...] * freqs_ref[...]                       # [TM, Hp] f32 (scale=1)
    # Split first matmul -> no lane-axis concatenate.  Padded freq lanes give sin(0)=0
    # and cos(0)=1, but the matching zero-padded w1c rows cancel the cos contribution.
    # (Invariant: keep w1c padding rows exactly zero.)
    s = jnp.sin(args).astype(jnp.bfloat16)
    c = jnp.cos(args).astype(jnp.bfloat16)
    h = (jnp.dot(s, w1s_ref[...], preferred_element_type=jnp.float32)
         + jnp.dot(c, w1c_ref[...], preferred_element_type=jnp.float32)
         + b1_ref[...])                                      # [TM, Dp] f32
    if bf16_silu:
        hb = h.astype(jnp.bfloat16)
        h2 = hb * jax.nn.sigmoid(hb)                         # bf16 VPU/EUP (v6e/v7x)
    else:
        h2 = (h * jax.nn.sigmoid(h)).astype(jnp.bfloat16)    # f32 SiLU (v5e-safe)
    out = jnp.dot(h2, w2_ref[...], preferred_element_type=jnp.float32) + b2_ref[...]
    out_ref[...] = out.astype(out_ref.dtype)


def _timestep_encoder_coltile_kernel(t_ref, freqs_ref, w1s_ref, w1c_ref, b1_ref,
                                     w2_ref, b2_ref, out_ref, h_ref, *, bf16_silu):
    """Column-tiled w2 variant: grid=(batch tiles, w2 column tiles).

    h (post-SiLU, bf16) is computed once per batch tile into VMEM scratch at j==0 and
    reused for every w2 column block, so VMEM is O(Dp*tn) instead of O(Dp^2).
    """
    j = pl.program_id(1)

    @pl.when(j == 0)
    def _():
        args = t_ref[...] * freqs_ref[...]
        s = jnp.sin(args).astype(jnp.bfloat16)
        c = jnp.cos(args).astype(jnp.bfloat16)
        h = (jnp.dot(s, w1s_ref[...], preferred_element_type=jnp.float32)
             + jnp.dot(c, w1c_ref[...], preferred_element_type=jnp.float32)
             + b1_ref[...])
        if bf16_silu:
            hb = h.astype(jnp.bfloat16)
            h_ref[...] = hb * jax.nn.sigmoid(hb)
        else:
            h_ref[...] = (h * jax.nn.sigmoid(h)).astype(jnp.bfloat16)

    out = (jnp.dot(h_ref[...], w2_ref[...], preferred_element_type=jnp.float32)
           + b2_ref[...])
    out_ref[...] = out.astype(out_ref.dtype)


# ---------------------------------------------------------------------------
# Parameter preparation (done ONCE, not per forward call)
# ---------------------------------------------------------------------------

def prepare_timestep_encoder_params(w1, b1, w2, b2, timestep_dims,
                                    max_period=10000.0, downscale_freq_shift=1.0,
                                    flip_sin_to_cos=False):
    """Pads / casts weights to TPU-friendly layouts. Call once at module init."""
    assert timestep_dims % 2 == 0, "odd timestep_dims (zero-pad path) not implemented"
    # TODO(synk): odd embedding_dim zero-padding path omitted (not needed for even dims).
    half = timestep_dims // 2
    assert half - downscale_freq_shift != 0, "half == downscale_freq_shift -> division by zero"
    model_dims = w1.shape[1]

    half_p = _round_up(half, 8)        # contraction axis: sublane alignment only
    d_p = _round_up(model_dims, 128)   # output lane axis: lane-dense

    exponent = -math.log(max_period) * jnp.arange(half, dtype=jnp.float32)
    exponent = exponent / (half - downscale_freq_shift)
    freqs = jnp.zeros((1, half_p), jnp.float32).at[0, :half].set(jnp.exp(exponent))

    if flip_sin_to_cos:
        w1_cos, w1_sin = w1[:half, :], w1[half:, :]
    else:
        w1_sin, w1_cos = w1[:half, :], w1[half:, :]

    def pad2(x, r, c):
        return jnp.zeros((r, c), x.dtype).at[:x.shape[0], :x.shape[1]].set(x)

    return dict(
        freqs=freqs,
        w1s=pad2(w1_sin.astype(jnp.float32), half_p, d_p).astype(jnp.bfloat16),
        w1c=pad2(w1_cos.astype(jnp.float32), half_p, d_p).astype(jnp.bfloat16),
        b1=pad2(b1.astype(jnp.float32)[None, :], 1, d_p),
        w2=pad2(w2.astype(jnp.float32), d_p, d_p).astype(jnp.bfloat16),
        b2=pad2(b2.astype(jnp.float32)[None, :], 1, d_p),
        model_dims=int(model_dims),
        half_p=int(half_p),
        d_p=int(d_p),
    )


# ---------------------------------------------------------------------------
# Hardware-aware sizing helpers
# ---------------------------------------------------------------------------

def _vmem_capacity_bytes():
    try:
        return int(pltpu.get_tpu_info().vmem_capacity_bytes)
    except Exception:
        return 64 << 20  # conservative: v7x per-TensorCore VMEM


def _use_bf16_silu():
    try:
        kind = jax.devices()[0].device_kind.lower()
    except Exception:
        return False
    return ("v6" in kind) or ("v7" in kind)   # bf16 VPU/EUP generations


def _weights_bytes_resident(half_p, d_p):
    # single-buffered resident weights: bf16 w1s+w1c+w2, f32 biases + freqs
    return 2 * (2 * half_p * d_p + d_p * d_p) + 4 * (2 * d_p + half_p)


def _estimate_vmem_resident(tm, half_p, d_p):
    tiles = 2 * tm * 4 + 2 * tm * d_p * 4                 # t + out tiles, double-buffered
    compute = 3 * tm * half_p * 4 + 2 * tm * d_p * 4 + 2 * tm * d_p * 2
    return _weights_bytes_resident(half_p, d_p) + tiles + compute + (2 << 20)


def _estimate_vmem_coltile(tm, tn, half_p, d_p):
    w_res = 2 * (2 * half_p * d_p) + 4 * (d_p + half_p)   # w1 halves + b1 + freqs (Buffered(1))
    w2_tiles = 2 * (2 * d_p * tn + 4 * tn)                # streamed w2/b2 column blocks (x2 buf)
    tiles = 2 * tm * 4 + 2 * tm * tn * 4
    scratch = tm * d_p * 2                                # bf16 h
    compute = 3 * tm * half_p * 4 + 2 * tm * d_p * 4 + tm * tn * 4
    return w_res + w2_tiles + tiles + scratch + compute + (2 << 20)


def _pick_tm(n, fits_fn):
    """Largest batch tile that fits VMEM while minimizing padded-row waste."""
    n8 = _round_up(max(int(n), 1), 8)
    candidates = sorted({c for c in (128, 256, 512, 1024) if c <= n8} | {n8})
    best = None
    for c in candidates:
        if not fits_fn(c):
            continue
        key = (_round_up(n8, c), -c)   # minimal padded rows, then prefer larger tile
        if best is None or key < best[0]:
            best = (key, c)
    return min(candidates) if best is None else best[1]


# ---------------------------------------------------------------------------
# Forward
# ---------------------------------------------------------------------------

def timestep_encoder_apply(params, timesteps, *, out_dtype=jnp.float32,
                           force_col_tile=False, tn=None):
    half_p, d_p, model_dims = params["half_p"], params["d_p"], params["model_dims"]
    n = int(timesteps.shape[0])

    vmem_cap = _vmem_capacity_bytes()
    vmem_budget = int(0.8 * vmem_cap)
    bf16_silu = _use_bf16_silu()

    # Column-tile w2 when keeping a Dp x Dp weight fully resident would crowd VMEM
    # (large model_dims, or v7x's 64 MiB per TensorCore).
    col_tile = (force_col_tile or d_p >= 2048
                or _weights_bytes_resident(half_p, d_p) > vmem_budget // 2)

    if col_tile:
        if tn is None:
            tn = 512 if d_p % 512 == 0 else (256 if d_p % 256 == 0 else 128)
        tn = min(int(tn), d_p)
        assert d_p % tn == 0
        fits = lambda tm: _estimate_vmem_coltile(tm, tn, half_p, d_p) <= vmem_budget
    else:
        fits = lambda tm: _estimate_vmem_resident(tm, half_p, d_p) <= vmem_budget

    tm = _pick_tm(n, fits)
    n_p = _round_up(_round_up(max(n, 1), 8), tm)
    grid_m = n_p // tm

    t2d = jnp.zeros((n_p, 1), jnp.float32).at[:n, 0].set(timesteps.astype(jnp.float32))

    # Only shard the batch axis across TensorCores when there are enough tiles to
    # amortize the duplicated resident-weight DMA (deliberate megacore use on v7x).
    batch_sem = "parallel" if grid_m >= 4 else "arbitrary"

    est = (_estimate_vmem_coltile(tm, tn, half_p, d_p) if col_tile
           else _estimate_vmem_resident(tm, half_p, d_p))
    vmem_limit = int(min(max(est, 16 << 20), int(0.85 * vmem_cap)))

    def call(single_buffer_resident):
        if single_buffer_resident:
            # Constant-index blocks are DMA'd once -> single buffer is enough.
            res = lambda shape, imap: pl.BlockSpec(shape, imap,
                                                   pipeline_mode=pl.Buffered(1))
        else:
            res = lambda shape, imap: pl.BlockSpec(shape, imap)

        if not col_tile:
            kernel = functools.partial(_timestep_encoder_kernel, bf16_silu=bf16_silu)
            grid = (grid_m,)
            in_specs = [
                pl.BlockSpec((tm, 1), lambda i: (i, 0)),          # timesteps tile
                res((1, half_p), lambda i: (0, 0)),               # freqs (resident)
                res((half_p, d_p), lambda i: (0, 0)),             # w1 sin half
                res((half_p, d_p), lambda i: (0, 0)),             # w1 cos half
                res((1, d_p), lambda i: (0, 0)),                  # b1
                res((d_p, d_p), lambda i: (0, 0)),                # w2
                res((1, d_p), lambda i: (0, 0)),                  # b2
            ]
            out_specs = pl.BlockSpec((tm, d_p), lambda i: (i, 0))
            scratch = []
            sems = (batch_sem,)
        else:
            kernel = functools.partial(_timestep_encoder_coltile_kernel,
                                       bf16_silu=bf16_silu)
            grid = (grid_m, d_p // tn)
            in_specs = [
                pl.BlockSpec((tm, 1), lambda i, j: (i, 0)),
                res((1, half_p), lambda i, j: (0, 0)),
                res((half_p, d_p), lambda i, j: (0, 0)),
                res((half_p, d_p), lambda i, j: (0, 0)),
                res((1, d_p), lambda i, j: (0, 0)),
                pl.BlockSpec((d_p, tn), lambda i, j: (0, j)),     # streamed w2 columns
                pl.BlockSpec((1, tn), lambda i, j: (0, j)),       # streamed b2 columns
            ]
            out_specs = pl.BlockSpec((tm, tn), lambda i, j: (i, j))
            scratch = [pltpu.VMEM((tm, d_p), jnp.bfloat16)]       # post-SiLU h
            sems = (batch_sem, "arbitrary")

        return pl.pallas_call(
            kernel,
            out_shape=jax.ShapeDtypeStruct((n_p, d_p), out_dtype),
            grid_spec=pltpu.PrefetchScalarGridSpec(
                num_scalar_prefetch=0,
                grid=grid,
                in_specs=in_specs,
                out_specs=out_specs,
                scratch_shapes=scratch,
            ),
            compiler_params=pltpu.CompilerParams(
                dimension_semantics=sems,
                vmem_limit_bytes=vmem_limit,
            ),
        )(t2d, params["freqs"], params["w1s"], params["w1c"],
          params["b1"], params["w2"], params["b2"])

    try:
        out = call(single_buffer_resident=True)
    except Exception:
        # Fallback if this jax version rejects pl.Buffered(1) on top-level BlockSpecs.
        out = call(single_buffer_resident=False)

    return out[:n, :model_dims]


def timestep_encoder(timesteps, w1, b1, w2, b2, timestep_dims,
                     max_period=10000.0, downscale_freq_shift=1.0,
                     flip_sin_to_cos=False, **kwargs):
    """Convenience wrapper (prepares params per call; prefer prepare+apply in a loop)."""
    params = prepare_timestep_encoder_params(w1, b1, w2, b2, timestep_dims,
                                             max_period, downscale_freq_shift,
                                             flip_sin_to_cos)
    return timestep_encoder_apply(params, timesteps, **kwargs)


# ---------------------------------------------------------------------------
# References
# ---------------------------------------------------------------------------

def reference_forward(timesteps, w1, b1, w2, b2, timestep_dims,
                      max_period=10000.0, downscale_freq_shift=1.0,
                      flip_sin_to_cos=False):
    """Pure-JAX f32 reference mirroring the PyTorch module."""
    half = timestep_dims // 2
    exponent = -math.log(max_period) * jnp.arange(half, dtype=jnp.float32)
    exponent = exponent / (half - downscale_freq_shift)
    freqs = jnp.exp(exponent)
    args = timesteps.astype(jnp.float32)[:, None] * freqs[None, :]
    s, c = jnp.sin(args), jnp.cos(args)
    emb = jnp.concatenate([c, s], -1) if flip_sin_to_cos else jnp.concatenate([s, c], -1)
    h = emb @ w1 + b1
    h = h * jax.nn.sigmoid(h)
    return h @ w2 + b2


def reference_forward_bf16(timesteps, w1, b1, w2, b2, timestep_dims,
                           max_period=10000.0, downscale_freq_shift=1.0,
                           flip_sin_to_cos=False, bf16_silu=False):
    """Reference mirroring the kernel's bf16 MXU operands (+ optional bf16 SiLU)."""
    half = timestep_dims // 2
    exponent = -math.log(max_period) * jnp.arange(half, dtype=jnp.float32)
    exponent = exponent / (half - downscale_freq_shift)
    freqs = jnp.exp(exponent)
    args = timesteps.astype(jnp.float32)[:, None] * freqs[None, :]
    s, c = jnp.sin(args), jnp.cos(args)
    emb = jnp.concatenate([c, s], -1) if flip_sin_to_cos else jnp.concatenate([s, c], -1)
    h = jnp.dot(emb.astype(jnp.bfloat16), w1.astype(jnp.bfloat16),
                preferred_element_type=jnp.float32) + b1
    if bf16_silu:
        hb = h.astype(jnp.bfloat16)
        h2 = (hb * jax.nn.sigmoid(hb)).astype(jnp.bfloat16)
    else:
        h2 = (h * jax.nn.sigmoid(h)).astype(jnp.bfloat16)
    return jnp.dot(h2, w2.astype(jnp.bfloat16),
                   preferred_element_type=jnp.float32) + b2


if __name__ == "__main__":
    # Small shapes consistent with the module's forward.
    N = 8                 # number of timesteps (batch)
    timestep_dims = 32    # sinusoidal embedding dim
    model_dims = 32       # projection dim

    key = jax.random.PRNGKey(0)
    k_t, k_w1, k_b1, k_w2, k_b2 = jax.random.split(key, 5)

    timesteps = jax.random.randint(k_t, (N,), 0, 1000).astype(jnp.float32)
    w1 = (jax.random.normal(k_w1, (timestep_dims, model_dims), jnp.float32)
          * (1.0 / math.sqrt(timestep_dims)))
    b1 = jax.random.normal(k_b1, (model_dims,), jnp.float32) * 0.01
    w2 = (jax.random.normal(k_w2, (model_dims, model_dims), jnp.float32)
          * (1.0 / math.sqrt(model_dims)))
    b2 = jax.random.normal(k_b2, (model_dims,), jnp.float32) * 0.01

    bf16_silu = _use_bf16_silu()
    tight_tol = 3e-2 if bf16_silu else 2e-3
    loose_tol = 8e-2 if bf16_silu else 5e-2

    # Prepare once (hoisted weight padding / casting), then apply.
    params = prepare_timestep_encoder_params(w1, b1, w2, b2, timestep_dims)
    out = jax.block_until_ready(timestep_encoder_apply(params, timesteps))
    assert out.shape == (N, model_dims)

    ref_q = reference_forward_bf16(timesteps, w1, b1, w2, b2, timestep_dims,
                                   bf16_silu=bf16_silu)
    assert jnp.allclose(out, ref_q, atol=tight_tol, rtol=tight_tol), \
        "mismatch vs bf16-matched reference"
    ref = reference_forward(timesteps, w1, b1, w2, b2, timestep_dims)
    assert jnp.allclose(out, ref, atol=loose_tol, rtol=loose_tol), \
        "mismatch vs f32 reference"

    # Exercise the column-tiled w2 path (used automatically for large model_dims / v7x VMEM).
    model_dims2 = 256
    k_w1b, k_b1b, k_w2b, k_b2b = jax.random.split(jax.random.PRNGKey(1), 4)
    w1b = (jax.random.normal(k_w1b, (timestep_dims, model_dims2), jnp.float32)
           * (1.0 / math.sqrt(timestep_dims)))
    b1b = jax.random.normal(k_b1b, (model_dims2,), jnp.float32) * 0.01
    w2b = (jax.random.normal(k_w2b, (model_dims2, model_dims2), jnp.float32)
           * (1.0 / math.sqrt(model_dims2)))
    b2b = jax.random.normal(k_b2b, (model_dims2,), jnp.float32) * 0.01

    params2 = prepare_timestep_encoder_params(w1b, b1b, w2b, b2b, timestep_dims)
    out2 = jax.block_until_ready(
        timestep_encoder_apply(params2, timesteps, force_col_tile=True, tn=128))
    assert out2.shape == (N, model_dims2)
    ref2_q = reference_forward_bf16(timesteps, w1b, b1b, w2b, b2b, timestep_dims,
                                    bf16_silu=bf16_silu)
    assert jnp.allclose(out2, ref2_q, atol=tight_tol, rtol=tight_tol), \
        "mismatch (col-tiled) vs bf16-matched reference"

    print("KERNEL_OK")
</pallas_src>

<mosaic_0001>
module attributes {stable_mosaic.version = 11 : i64} {
  func.func @_timestep_encoder_kernel(%arg0: i32, %arg1: memref<8x1xf32, #tpu.memory_space<vmem>>, %arg2: memref<1x16xf32, #tpu.memory_space<vmem>>, %arg3: memref<16x128xbf16, #tpu.memory_space<vmem>>, %arg4: memref<16x128xbf16, #tpu.memory_space<vmem>>, %arg5: memref<1x128xf32, #tpu.memory_space<vmem>>, %arg6: memref<128x128xbf16, #tpu.memory_space<vmem>>, %arg7: memref<1x128xf32, #tpu.memory_space<vmem>>, %arg8: memref<8x128xf32, #tpu.memory_space<vmem>>) attributes {dimension_semantics = [#tpu.dimension_semantics<arbitrary>], iteration_bounds = array<i64: 1>, scalar_prefetch = 0 : i64, scratch_operands = 0 : i64, tpu.core_type = #tpu.core_type<tc>, window_params = [{transform_indices = @transform_0, window_bounds = array<i64: 8, 1>}, {pipeline_mode = #tpu.pipeline_mode<synchronous>, transform_indices = @transform_1, window_bounds = array<i64: 1, 16>}, {pipeline_mode = #tpu.pipeline_mode<synchronous>, transform_indices = @transform_2, window_bounds = array<i64: 16, 128>}, {pipeline_mode = #tpu.pipeline_mode<synchronous>, transform_indices = @transform_3, window_bounds = array<i64: 16, 128>}, {pipeline_mode = #tpu.pipeline_mode<synchronous>, transform_indices = @transform_4, window_bounds = array<i64: 1, 128>}, {pipeline_mode = #tpu.pipeline_mode<synchronous>, transform_indices = @transform_5, window_bounds = array<i64: 128, 128>}, {pipeline_mode = #tpu.pipeline_mode<synchronous>, transform_indices = @transform_6, window_bounds = array<i64: 1, 128>}, {transform_indices = @transform_7, window_bounds = array<i64: 8, 128>}]} {
    %c0 = arith.constant 0 : index
    %c0_0 = arith.constant 0 : index
    %0 = vector.load %arg1[%c0, %c0_0] : memref<8x1xf32, #tpu.memory_space<vmem>>, vector<8x1xf32>
    %c0_1 = arith.constant 0 : index
    %c0_2 = arith.constant 0 : index
    %1 = vector.load %arg2[%c0_1, %c0_2] : memref<1x16xf32, #tpu.memory_space<vmem>>, vector<1x16xf32>
    %2 = vector.broadcast %0 : vector<8x1xf32> to vector<8x16xf32>
    %3 = vector.broadcast %1 : vector<1x16xf32> to vector<8x16xf32>
    %4 = arith.mulf %2, %3 : vector<8x16xf32>
    %5 = math.sin %4 : vector<8x16xf32>
    %6 = arith.truncf %5 : vector<8x16xf32> to vector<8x16xbf16>
    %7 = math.cos %4 : vector<8x16xf32>
    %8 = arith.truncf %7 : vector<8x16xf32> to vector<8x16xbf16>
    %c0_3 = arith.constant 0 : index
    %c0_4 = arith.constant 0 : index
    %9 = vector.load %arg3[%c0_3, %c0_4] : memref<16x128xbf16, #tpu.memory_space<vmem>>, vector<16x128xbf16>
    %cst = arith.constant dense<0.000000e+00> : vector<8x128xf32>
    %10 = tpu.matmul %6, %9, %cst {dimension_numbers = #tpu.dot_dimension_numbers<[1], [0], [0], [1], [0, 0, 1, 1], [], []>} : vector<8x16xbf16>, vector<16x128xbf16>, vector<8x128xf32> -> vector<8x128xf32>
    %c0_5 = arith.constant 0 : index
    %c0_6 = arith.constant 0 : index
    %11 = vector.load %arg4[%c0_5, %c0_6] : memref<16x128xbf16, #tpu.memory_space<vmem>>, vector<16x128xbf16>
    %cst_7 = arith.constant dense<0.000000e+00> : vector<8x128xf32>
    %12 = tpu.matmul %8, %11, %cst_7 {dimension_numbers = #tpu.dot_dimension_numbers<[1], [0], [0], [1], [0, 0, 1, 1], [], []>} : vector<8x16xbf16>, vector<16x128xbf16>, vector<8x128xf32> -> vector<8x128xf32>
    %13 = arith.addf %10, %12 : vector<8x128xf32>
    %c0_8 = arith.constant 0 : index
    %c0_9 = arith.constant 0 : index
    %14 = vector.load %arg5[%c0_8, %c0_9] : memref<1x128xf32, #tpu.memory_space<vmem>>, vector<1x128xf32>
    %15 = vector.broadcast %14 : vector<1x128xf32> to vector<8x128xf32>
    %16 = arith.addf %13, %15 : vector<8x128xf32>
    %17 = arith.negf %16 : vector<8x128xf32>
    %18 = math.exp %17 : vector<8x128xf32>
    %cst_10 = arith.constant 1.000000e+00 : f32
    %19 = vector.broadcast %cst_10 : f32 to vector<8x128xf32>
    %20 = arith.addf %19, %18 : vector<8x128xf32>
    %21 = arith.divf %19, %20 : vector<8x128xf32>
    %22 = arith.mulf %16, %21 : vector<8x128xf32>
    %23 = arith.truncf %22 : vector<8x128xf32> to vector<8x128xbf16>
    %c0_11 = arith.constant 0 : index
    %c0_12 = arith.constant 0 : index
    %24 = vector.load %arg6[%c0_11, %c0_12] : memref<128x128xbf16, #tpu.memory_space<vmem>>, vector<128x128xbf16>
    %cst_13 = arith.constant dense<0.000000e+00> : vector<8x128xf32>
    %25 = tpu.matmul %23, %24, %cst_13 {dimension_numbers = #tpu.dot_dimension_numbers<[1], [0], [0], [1], [0, 0, 1, 1], [], []>} : vector<8x128xbf16>, vector<128x128xbf16>, vector<8x128xf32> -> vector<8x128xf32>
    %c0_14 = arith.constant 0 : index
    %c0_15 = arith.constant 0 : index
    %26 = vector.load %arg7[%c0_14, %c0_15] : memref<1x128xf32, #tpu.memory_space<vmem>>, vector<1x128xf32>
    %27 = vector.broadcast %26 : vector<1x128xf32> to vector<8x128xf32>
    %28 = arith.addf %25, %27 : vector<8x128xf32>
    %c0_16 = arith.constant 0 : index
    %c0_17 = arith.constant 0 : index
    %29 = vector.load %arg8[%c0_16, %c0_17] : memref<8x128xf32, #tpu.memory_space<vmem>>, vector<8x128xf32>
    tpu.vector_store %arg8[%c0_16, %c0_17], %28 {strides = array<i32>} : memref<8x128xf32, #tpu.memory_space<vmem>>, vector<8x128xf32>,
    return
  }
  func.func @transform_0(%arg0: i32) -> (i32, i32) {
    %c0_i32 = arith.constant 0 : i32
    %c0_i32_0 = arith.constant 0 : i32
    return %arg0, %c0_i32 : i32, i32
  }
  func.func @transform_1(%arg0: i32) -> (i32, i32) {
    %c0_i32 = arith.constant 0 : i32
    %c0_i32_0 = arith.constant 0 : i32
    %c0_i32_1 = arith.constant 0 : i32
    return %c0_i32, %c0_i32_0 : i32, i32
  }
  func.func @transform_2(%arg0: i32) -> (i32, i32) {
    %c0_i32 = arith.constant 0 : i32
    %c0_i32_0 = arith.constant 0 : i32
    %c0_i32_1 = arith.constant 0 : i32
    return %c0_i32, %c0_i32_0 : i32, i32
  }
  func.func @transform_3(%arg0: i32) -> (i32, i32) {
    %c0_i32 = arith.constant 0 : i32
    %c0_i32_0 = arith.constant 0 : i32
    %c0_i32_1 = arith.constant 0 : i32
    return %c0_i32, %c0_i32_0 : i32, i32
  }
  func.func @transform_4(%arg0: i32) -> (i32, i32) {
    %c0_i32 = arith.constant 0 : i32
    %c0_i32_0 = arith.constant 0 : i32
    %c0_i32_1 = arith.constant 0 : i32
    return %c0_i32, %c0_i32_0 : i32, i32
  }
  func.func @transform_5(%arg0: i32) -> (i32, i32) {
    %c0_i32 = arith.constant 0 : i32
    %c0_i32_0 = arith.constant 0 : i32
    %c0_i32_1 = arith.constant 0 : i32
    return %c0_i32, %c0_i32_0 : i32, i32
  }
  func.func @transform_6(%arg0: i32) -> (i32, i32) {
    %c0_i32 = arith.constant 0 : i32
    %c0_i32_0 = arith.constant 0 : i32
    %c0_i32_1 = arith.constant 0 : i32
    return %c0_i32, %c0_i32_0 : i32, i32
  }
  func.func @transform_7(%arg0: i32) -> (i32, i32) {
    %c0_i32 = arith.constant 0 : i32
    %c0_i32_0 = arith.constant 0 : i32
    return %arg0, %c0_i32 : i32, i32
  }
}

module attributes {stable_mosaic.version = 11 : i64} {
  func.func @_timestep_encoder_kernel(%arg0: i32, %arg1: memref<8x1xf32, #tpu.memory_space<vmem>>, %arg2: memref<1x16xf32, #tpu.memory_space<vmem>>, %arg3: memref<16x128xbf16, #tpu.memory_space<vmem>>, %arg4: memref<16x128xbf16, #tpu.memory_space<vmem>>, %arg5: memref<1x128xf32, #tpu.memory_space<vmem>>, %arg6: memref<128x128xbf16, #tpu.memory_space<vmem>>, %arg7: memref<1x128xf32, #tpu.memory_space<vmem>>, %arg8: memref<8x128xf32, #tpu.memory_space<vmem>>) attributes {dimension_semantics = [#tpu.dimension_semantics<arbitrary>], iteration_bounds = array<i64: 1>, scalar_prefetch = 0 : i64, scratch_operands = 0 : i64, tpu.core_type = #tpu.core_type<tc>, window_params = [{transform_indices = @transform_0, window_bounds = array<i64: 8, 1>}, {pipeline_mode = #tpu.pipeline_mode<synchronous>, transform_indices = @transform_1, window_bounds = array<i64: 1, 16>}, {pipeline_mode = #tpu.pipeline_mode<synchronous>, transform_indices = @transform_2, window_bounds = array<i64: 16, 128>}, {pipeline_mode = #tpu.pipeline_mode<synchronous>, transform_indices = @transform_3, window_bounds = array<i64: 16, 128>}, {pipeline_mode = #tpu.pipeline_mode<synchronous>, transform_indices = @transform_4, window_bounds = array<i64: 1, 128>}, {pipeline_mode = #tpu.pipeline_mode<synchronous>, transform_indices = @transform_5, window_bounds = array<i64: 128, 128>}, {pipeline_mode = #tpu.pipeline_mode<synchronous>, transform_indices = @transform_6, window_bounds = array<i64: 1, 128>}, {transform_indices = @transform_7, window_bounds = array<i64: 8, 128>}]} {
    %c0 = arith.constant 0 : index
    %c0_0 = arith.constant 0 : index
    %0 = vector.load %arg1[%c0, %c0_0] : memref<8x1xf32, #tpu.memory_space<vmem>>, vector<8x1xf32>
    %c0_1 = arith.constant 0 : index
    %c0_2 = arith.constant 0 : index
    %1 = vector.load %arg2[%c0_1, %c0_2] : memref<1x16xf32, #tpu.memory_space<vmem>>, vector<1x16xf32>
    %2 = vector.broadcast %0 : vector<8x1xf32> to vector<8x16xf32>
    %3 = vector.broadcast %1 : vector<1x16xf32> to vector<8x16xf32>
    %4 = arith.mulf %2, %3 : vector<8x16xf32>
    %5 = math.sin %4 : vector<8x16xf32>
    %6 = arith.truncf %5 : vector<8x16xf32> to vector<8x16xbf16>
    %7 = math.cos %4 : vector<8x16xf32>
    %8 = arith.truncf %7 : vector<8x16xf32> to vector<8x16xbf16>
    %c0_3 = arith.constant 0 : index
    %c0_4 = arith.constant 0 : index
    %9 = vector.load %arg3[%c0_3, %c0_4] : memref<16x128xbf16, #tpu.memory_space<vmem>>, vector<16x128xbf16>
    %cst = arith.constant dense<0.000000e+00> : vector<8x128xf32>
    %10 = tpu.matmul %6, %9, %cst {dimension_numbers = #tpu.dot_dimension_numbers<[1], [0], [0], [1], [0, 0, 1, 1], [], []>} : vector<8x16xbf16>, vector<16x128xbf16>, vector<8x128xf32> -> vector<8x128xf32>
    %c0_5 = arith.constant 0 : index
    %c0_6 = arith.constant 0 : index
    %11 = vector.load %arg4[%c0_5, %c0_6] : memref<16x128xbf16, #tpu.memory_space<vmem>>, vector<16x128xbf16>
    %cst_7 = arith.constant dense<0.000000e+00> : vector<8x128xf32>
    %12 = tpu.matmul %8, %11, %cst_7 {dimension_numbers = #tpu.dot_dimension_numbers<[1], [0], [0], [1], [0, 0, 1, 1], [], []>} : vector<8x16xbf16>, vector<16x128xbf16>, vector<8x128xf32> -> vector<8x128xf32>
    %13 = arith.addf %10, %12 : vector<8x128xf32>
    %c0_8 = arith.constant 0 : index
    %c0_9 = arith.constant 0 : index
    %14 = vector.load %arg5[%c0_8, %c0_9] : memref<1x128xf32, #tpu.memory_space<vmem>>, vector<1x128xf32>
    %15 = vector.broadcast %14 : vector<1x128xf32> to vector<8x128xf32>
    %16 = arith.addf %13, %15 : vector<8x128xf32>
    %17 = arith.negf %16 : vector<8x128xf32>
    %18 = math.exp %17 : vector<8x128xf32>
    %cst_10 = arith.constant 1.000000e+00 : f32
    %19 = vector.broadcast %cst_10 : f32 to vector<8x128xf32>
    %20 = arith.addf %19, %18 : vector<8x128xf32>
    %21 = arith.divf %19, %20 : vector<8x128xf32>
    %22 = arith.mulf %16, %21 : vector<8x128xf32>
    %23 = arith.truncf %22 : vector<8x128xf32> to vector<8x128xbf16>
    %c0_11 = arith.constant 0 : index
    %c0_12 = arith.constant 0 : index
    %24 = vector.load %arg6[%c0_11, %c0_12] : memref<128x128xbf16, #tpu.memory_space<vmem>>, vector<128x128xbf16>
    %cst_13 = arith.constant dense<0.000000e+00> : vector<8x128xf32>
    %25 = tpu.matmul %23, %24, %cst_13 {dimension_numbers = #tpu.dot_dimension_numbers<[1], [0], [0], [1], [0, 0, 1, 1], [], []>} : vector<8x128xbf16>, vector<128x128xbf16>, vector<8x128xf32> -> vector<8x128xf32>
    %c0_14 = arith.constant 0 : index
    %c0_15 = arith.constant 0 : index
    %26 = vector.load %arg7[%c0_14, %c0_15] : memref<1x128xf32, #tpu.memory_space<vmem>>, vector<1x128xf32>
    %27 = vector.broadcast %26 : vector<1x128xf32> to vector<8x128xf32>
    %28 = arith.addf %25, %27 : vector<8x128xf32>
    %c0_16 = arith.constant 0 : index
    %c0_17 = arith.constant 0 : index
    %29 = vector.load %arg8[%c0_16, %c0_17] : memref<8x128xf32, #tpu.memory_space<vmem>>, vector<8x128xf32>
    tpu.vector_store %arg8[%c0_16, %c0_17], %28 {strides = array<i32>} : memref<8x128xf32, #tpu.memory_space<vmem>>, vector<8x128xf32>,
    return
  }
  func.func @transform_0(%arg0: i32) -> (i32, i32) {
    %c0_i32 = arith.constant 0 : i32
    %c0_i32_0 = arith.constant 0 : i32
    return %arg0, %c0_i32 : i32, i32
  }
  func.func @transform_1(%arg0: i32) -> (i32, i32) {
    %c0_i32 = arith.constant 0 : i32
    %c0_i32_0 = arith.constant 0 : i32
    %c0_i32_1 = arith.constant 0 : i32
    return %c0_i32, %c0_i32_0 : i32, i32
  }
  func.func @transform_2(%arg0: i32) -> (i32, i32) {
    %c0_i32 = arith.constant 0 : i32
    %c0_i32_0 = arith.constant 0 : i32
    %c0_i32_1 = arith.constant 0 : i32
    return %c0_i32, %c0_i32_0 : i32, i32
  }
  func.func @transform_3(%arg0: i32) -> (i32, i32) {
    %c0_i32 = arith.constant 0 : i32
    %c0_i32_0 = arith.constant 0 : i32
    %c0_i32_1 = arith.constant 0 : i32
    return %c0_i32, %c0_i32_0 : i32, i32
  }
  func.func @transform_4(%arg0: i32) -> (i32, i32) {
    %c0_i32 = arith.constant 0 : i32
    %c0_i32_0 = arith.constant 0 : i32
    %c0_i32_1 = arith.constant 0 : i32
    return %c0_i32, %c0_i32_0 : i32, i32
  }
  func.func @transform_5(%arg0: i32) -> (i32, i32) {
    %c0_i32 = arith.constant 0 : i32
    %c0_i32_0 = arith.constant 0 : i32
    %c0_i32_1 = arith.constant 0 : i32
    return %c0_i32, %c0_i32_0 : i32, i32
  }
  func.func @transform_6(%arg0: i32) -> (i32, i32) {
    %c0_i32 = arith.constant 0 : i32
    %c0_i32_0 = arith.constant 0 : i32
    %c0_i32_1 = arith.constant 0 : i32
    return %c0_i32, %c0_i32_0 : i32, i32
  }
  func.func @transform_7(%arg0: i32) -> (i32, i32) {
    %c0_i32 = arith.constant 0 : i32
    %c0_i32_0 = arith.constant 0 : i32
    return %arg0, %c0_i32 : i32, i32
  }
}

</mosaic_0001>

<llo_original>
// kernel: tpu_custom_call.1
$region0: #{tpu_custom_call.1}
  #allocation0 [shape = 'u32[]', space=smem, size = 0x4, offset = 0x4, fixed_abs, tag = 'smem constant byte address 0x4 - core index']
  #allocation1 [shape = 'u32[72,128]{1,0:T(1,128)}', space=vmem, size = 0x9000, scoped, tag = 'internal scratch']
  %s0 = inlined_call_operand.vmem [shape: f32[8,1], index: 0, kind: input, shape index: {}]
  %s1 = inlined_call_operand.vmem [shape: f32[1,16], index: 1, kind: input, shape index: {}]
  %s2 = inlined_call_operand.vmem [shape: bf16[16,128], index: 2, kind: input, shape index: {}]
  %s3 = inlined_call_operand.hbm [shape: bf16[16,128], index: 3, kind: input, shape index: {}]
  %s4 = inlined_call_operand.vmem [shape: f32[1,128], index: 4, kind: input, shape index: {}]
  %s5 = inlined_call_operand.hbm [shape: bf16[128,128], index: 5, kind: input, shape index: {}]
  %s6 = inlined_call_operand.vmem [shape: f32[1,128], index: 6, kind: input, shape index: {}]
  %s7 = inlined_call_operand.hbm [shape: f32[8,128], index: 7, kind: output, shape index: {}]
  %s8 = sld [smem:[#allocation0]]
  $region46: #{tpu_custom_call.1} parent=0
    _
  %s10 = ssub.s32 1, %s8
  %s11 = scalar_select 0, %s10, %s8
  $region1: #{tpu_custom_call.1} parent=0
    #allocation2 [shape = 'u8[4096]{0}', space=vmem, size = 0x1000, scoped, tag = 'input window, operand 3, single buffered']
    #allocation3 [shape = 's32[1]{0}', space=sflag, size = 0x4, scoped, tag = 'scoped memory for tpu_custom_call.1']
    #allocation4 [shape = 's32[1]{0}', space=sflag, size = 0x4, scoped, tag = 'scoped memory for tpu_custom_call.1']
    #allocation5 [shape = 'u8[32768]{0}', space=vmem, size = 0x8000, scoped, tag = 'input window, operand 5, single buffered']
    #allocation6 [shape = 's32[1]{0}', space=sflag, size = 0x4, scoped, tag = 'scoped memory for tpu_custom_call.1']
    #allocation7 [shape = 'u8[4096]{0}', space=vmem, size = 0x1000, scoped, tag = 'output window, operand 0, single buffered']
    %12 = vsyncpa [#allocation3], 0
    %13 = vsyncpa [#allocation6], 0
    %14 = vsyncpa [#allocation4], 0
    // Predicated region
    $region2: #{tpu_custom_call.1} parent=1 // pred_check
      _
    $region3: #{tpu_custom_call.1} parent=1 // pred_check_branch
      %16 = sbr.rel (0) target = $region5
    $region4: #{tpu_custom_call.1} parent=1 // pred_region
      _
    $region5: #{tpu_custom_call.1} parent=1 // pred_fallthru
      _
    // Predicated region
    $region6: #{tpu_custom_call.1} parent=1 // pred_check
      _
    $region7: #{tpu_custom_call.1} parent=1 // pred_check_branch
      %18 = sbr.rel (0) target = $region9
    $region8: #{tpu_custom_call.1} parent=1 // pred_region
      _
    $region9: #{tpu_custom_call.1} parent=1 // pred_fallthru
      _
    // Predicated region
    $region10: #{tpu_custom_call.1} parent=1 // pred_check
      _
    $region11: #{tpu_custom_call.1} parent=1 // pred_check_branch
      %20 = sbr.rel (0) target = $region13
    $region12: #{tpu_custom_call.1} parent=1 // pred_region
      _
    $region13: #{tpu_custom_call.1} parent=1 // pred_fallthru
      _
    // Predicated region
    $region14: #{tpu_custom_call.1} parent=1 // pred_check
      _
    $region15: #{tpu_custom_call.1} parent=1 // pred_check_branch
      %22 = sbr.rel (0) target = $region17
    $region16: #{tpu_custom_call.1} parent=1 // pred_region
      %24 = vsyncadd [#allocation3], 0
      %s25 = sshll.u32 %s3, 4
      %s26 = int_to_ptr.hbm [resolvable:$true] %s25
      %s27 = sshll.u32 [#allocation2], 4
      %s28 = int_to_ptr.vmem [resolvable:$true] %s27
      %33 = dma.hbm_to_vmem [thread:$0]  %s26, 128, %s28, [#allocation3], 64, 64, 4
    $region17: #{tpu_custom_call.1} parent=1 // pred_fallthru
      _
    // Predicated region
    $region18: #{tpu_custom_call.1} parent=1 // pred_check
      _
    $region19: #{tpu_custom_call.1} parent=1 // pred_check_branch
      %35 = sbr.rel (0) target = $region21
    $region20: #{tpu_custom_call.1} parent=1 // pred_region
      _
    $region21: #{tpu_custom_call.1} parent=1 // pred_fallthru
      _
    // Predicated region
    $region22: #{tpu_custom_call.1} parent=1 // pred_check
      _
    $region23: #{tpu_custom_call.1} parent=1 // pred_check_branch
      %37 = sbr.rel (0) target = $region25
    $region24: #{tpu_custom_call.1} parent=1 // pred_region
      %39 = vsyncadd [#allocation6], 0
      %s40 = sshll.u32 %s5, 4
      %s41 = int_to_ptr.hbm [resolvable:$true] %s40
      %s42 = sshll.u32 [#allocation5], 4
      %s43 = int_to_ptr.vmem [resolvable:$true] %s42
      %48 = dma.hbm_to_vmem [thread:$0]  %s41, 1024, %s43, [#allocation6], 64, 64, 4
    $region25: #{tpu_custom_call.1} parent=1 // pred_fallthru
      _
    // Predicated region
    $region26: #{tpu_custom_call.1} parent=1 // pred_check
      _
    $region27: #{tpu_custom_call.1} parent=1 // pred_check_branch
      %50 = sbr.rel (0) target = $region29
    $region28: #{tpu_custom_call.1} parent=1 // pred_region
      _
    $region29: #{tpu_custom_call.1} parent=1 // pred_fallthru
      _
    // Predicated region
    $region30: #{tpu_custom_call.1} parent=1 // pred_check
      _
    $region31: #{tpu_custom_call.1} parent=1 // pred_check_branch
      %52 = sbr.rel (0) target = $region33
    $region32: #{tpu_custom_call.1} parent=1 // pred_region
      %54 = dma.done [#allocation3], 128
    $region33: #{tpu_custom_call.1} parent=1 // pred_fallthru
      _
    // Predicated region
    $region34: #{tpu_custom_call.1} parent=1 // pred_check
      _
    $region35: #{tpu_custom_call.1} parent=1 // pred_check_branch
      %56 = sbr.rel (0) target = $region37
    $region36: #{tpu_custom_call.1} parent=1 // pred_region
      %58 = dma.done [#allocation6], 1024
    $region37: #{tpu_custom_call.1} parent=1 // pred_fallthru
      _
    %v60 = vld [vmem:[%s0] sm:$0xff]
    %v61 = vld [vmem:[%s1] sm:$0x1]
    %63 = vset.pattern.permute.xlu0 0
    %64 = vperm.xlu0 %63, %v60
    %v65 = vpop.permute.xlu0 %64
    %v68 = vperm.slane %v61, 0
    %v70 = vmul.f32 %v65, %v68
    %v71 = vand.u32 2147483647, %v70
    %vm72 = vcmp.le.f32.partialorder %v71, 0.7853982
    %vm73 = vcmp.lt.s32.totalorder %v70, 0
    %v74 = vand.u32 %v70, 2139095040
    %v75 = vshrl.u32 %v74, 23
    %v76 = vsub.s32 %v75, 127
    %v77 = vand.u32 2147483647, %v70
    %v78 = vand.u32 %v77, 8388607
    %v79 = vor.u32 %v78, 8388608
    %v80 = vsub.s32 0, %v79
    %v81 = vadd.s32 %v76, 1
    %vm82 = vcmp.gt.s32.totalorder %v81, 0
    %v83 = vsel %vm82, %v81, 0
    %v84 = vshrl.u32 %v83, 5
    %v85 = vand.u32 %v83, 31
    %v86 = vsub.s32 32, %v85
    %v87 = vshrl.u32 683565275, %v86
    %v88 = vshll.u32 683565275, %v85
    %v89 = vshrl.u32 2475754826, %v86
    %v90 = vor.u32 %v88, %v89
    %v91 = vshll.u32 2475754826, %v85
    %v92 = vshrl.u32 2131351028, %v86
    %v93 = vor.u32 %v91, %v92
    %v94 = vshll.u32 2131351028, %v85
    %v95 = vshrl.u32 2102212464, %v86
    %v96 = vor.u32 %v94, %v95
    %v97 = vshll.u32 2102212464, %v85
    %v98 = vshrl.u32 920167782, %v86
    %v99 = vor.u32 %v97, %v98
    %v100 = vshll.u32 920167782, %v85
    %v101 = vshrl.u32 1326507024, %v86
    %v102 = vor.u32 %v100, %v101
    %vm103 = vcmp.lt.s32.totalorder %v84, 1
    %vm104 = vcmp.lt.s32.totalorder %v84, 2
    %vm105 = vcmp.lt.s32.totalorder %v84, 3
    %vm106 = vcmp.lt.s32.totalorder %v84, 4
    %v107 = vsel %vm103, %v87, %v90
    %v108 = vsel %vm106, %v96, 2102212464
    %v109 = vsel %vm105, %v93, %v108
    %v110 = vsel %vm104, %v107, %v109
    %v111 = vsel %vm103, %v90, %v93
    %v112 = vsel %vm106, %v99, 920167782
    %v113 = vsel %vm105, %v96, %v112
    %v114 = vsel %vm104, %v111, %v113
    %v115 = vsel %vm103, %v93, %v96
    %v116 = vsel %vm106, %v102, 1326507024
    %v117 = vsel %vm105, %v99, %v116
    %v118 = vsel %vm104, %v115, %v117
    %v119 = vshll.u32 %v79, 8
    %v120 = vand.u32 %v119, 65535
    %v121 = vshrl.u32 %v119, 16
    %v122 = vand.u32 %v118, 65535
    %v123 = vshrl.u32 %v118, 16
    %v124 = vmul.u32 %v120, %v122
    %v125 = vmul.u32 %v120, %v123
    %v126 = vmul.u32 %v121, %v122
    %v127 = vmul.u32 %v121, %v123
    %v128 = vshll.u32 %v125, 16
    %v129 = vshrl.u32 %v125, 16
    %v130 = vshll.u32 %v126, 16
    %v131 = vshrl.u32 %v126, 16
    %vm132 = vc.u32 %v124, %v128
    %v133 = vsel %vm132, 1, 0
    %v134 = vadd.s32 %v124, %v128
    %v135 = vadd.s32 %v127, %v133
    %vm136 = vc.u32 %v134, %v130
    %v137 = vsel %vm136, 1, 0
    %v138 = vadd.s32 %v134, %v130
    %v139 = vadd.s32 %v135, %v137
    %v140 = vadd.s32 %v139, %v129
    %v141 = vadd.s32 %v140, %v131
    %v142 = vand.u32 %v119, 65535
    %v143 = vshrl.u32 %v119, 16
    %v144 = vand.u32 %v114, 65535
    %v145 = vshrl.u32 %v114, 16
    %v146 = vmul.u32 %v142, %v144
    %v147 = vmul.u32 %v142, %v145
    %v148 = vmul.u32 %v143, %v144
    %v149 = vmul.u32 %v143, %v145
    %v150 = vshll.u32 %v147, 16
    %v151 = vshrl.u32 %v147, 16
    %v152 = vshll.u32 %v148, 16
    %v153 = vshrl.u32 %v148, 16
    %vm154 = vc.u32 %v146, %v150
    %v155 = vsel %vm154, 1, 0
    %v156 = vadd.s32 %v146, %v150
    %v157 = vadd.s32 %v149, %v155
    %vm158 = vc.u32 %v156, %v152
    %v159 = vsel %vm158, 1, 0
    %v160 = vadd.s32 %v156, %v152
    %v161 = vadd.s32 %v157, %v159
    %v162 = vadd.s32 %v161, %v151
    %v163 = vadd.s32 %v162, %v153
    %v164 = vmul.u32 %v119, %v110
    %v165 = vadd.s32 %v141, %v160
    %vm166 = vc.u32 %v141, %v160
    %v167 = vadd.s32 %v163, 1
    %v168 = vsel %vm166, %v167, %v163
    %v169 = vadd.s32 %v164, %v168
    %v170 = vadd.s32 %v169, 536870912
    %v171 = vshrl.u32 %v170, 30
    %v172 = vshll.u32 %v171, 30
    %v173 = vsub.s32 %v169, %v172
    %vm174 = vcmp.lt.s32.totalorder %v173, 0
    %v175 = vsub.s32 0, %v173
    %v176 = vsel %vm174, %v175, %v173
    %v177 = vclz %v176
    %v178 = vsub.s32 %v177, 2
    %vm179 = vcmp.gt.s32.totalorder 0, %v178
    %v180 = vsel %vm179, 0, %v178
    %v181 = vsub.s32 32, %v180
    %v182 = vshll.u32 %v173, %v180
    %v183 = vshrl.u32 %v165, %v181
    %v184 = vor.u32 %v182, %v183
    %v185 = vsub.s32 4294967266, %v180
    %v186 = vadd.s32 %v185, 127
    %v187 = vshll.u32 %v186, 23
    %v188 = vor.u32 4788187, %v187
    %v189 = vand.u32 2147483647, %v188
    %v191 = vcvt.s32.f32 %v184
    %v192 = vmul.f32 %v191, %v189
    %v193 = vxor.u32 %v192, 2147483648
    %v194 = vsel %vm73, %v193, %v192
    %v195 = vsub.s32 4, %v171
    %v196 = vsel %vm73, %v195, %v171
    %v197 = vsel %vm72, %v70, %v194
    %v198 = vsel %vm72, 0, %v196
    %v199 = vmul.f32 %v197, %v197
    %v200 = vmul.f32 %v199, -0.001358992
    %v201 = vadd.f32 %v200, 0.041655596
    %v202 = vmul.f32 %v199, %v201
    %v203 = vadd.f32 %v202, -0.4999988
    %v204 = vmul.f32 %v199, %v203
    %v205 = vadd.f32 1.0, %v204
    %v206 = vmul.f32 %v197, %v197
    %v207 = vmul.f32 %v206, -0.00019511016
    %v208 = vadd.f32 %v207, 0.008332121
    %v209 = vmul.f32 %v206, %v208
    %v210 = vadd.f32 %v209, -0.16666654
    %v211 = vmul.f32 %v206, %v210
    %v212 = vadd.f32 %v211, 1.0
    %v213 = vmul.f32 %v212, %v197
    %vm214 = vweird.f32 %v70
    %v215 = vadd.s32 %v198, 3
    %v216 = vand.u32 %v215, 3
    %vm217 = vcmp.lt.s32.totalorder %v216, 2
    %vm218 = vcmp.eq.s32.totalorder %v216, 0
    %v219 = vxor.u32 %v213, 2147483648
    %v220 = vsel %vm218, %v205, %v219
    %vm221 = vcmp.eq.s32.totalorder %v216, 2
    %v222 = vxor.u32 %v205, 2147483648
    %v223 = vsel %vm221, %v222, %v213
    %v224 = vsel %vm217, %v220, %v223
    %v225 = vsel %vm214, nan, %v224
    %v226 = vpack.c.bf16 %v225, %v225
    %v227 = vand.u32 2147483647, %v70
    %vm228 = vcmp.le.f32.partialorder %v227, 0.7853982
    %vm229 = vcmp.lt.s32.totalorder %v70, 0
    %v230 = vand.u32 %v70, 2139095040
    %v231 = vshrl.u32 %v230, 23
    %v232 = vsub.s32 %v231, 127
    %v233 = vand.u32 2147483647, %v70
    %v234 = vand.u32 %v233, 8388607
    %v235 = vor.u32 %v234, 8388608
    %v236 = vsub.s32 0, %v235
    %v237 = vadd.s32 %v232, 1
    %vm238 = vcmp.gt.s32.totalorder %v237, 0
    %v239 = vsel %vm238, %v237, 0
    %v240 = vshrl.u32 %v239, 5
    %v241 = vand.u32 %v239, 31
    %v242 = vsub.s32 32, %v241
    %v243 = vshrl.u32 683565275, %v242
    %v244 = vshll.u32 683565275, %v241
    %v245 = vshrl.u32 2475754826, %v242
    %v246 = vor.u32 %v244, %v245
    %v247 = vshll.u32 2475754826, %v241
    %v248 = vshrl.u32 2131351028, %v242
    %v249 = vor.u32 %v247, %v248
    %v250 = vshll.u32 2131351028, %v241
    %v251 = vshrl.u32 2102212464, %v242
    %v252 = vor.u32 %v250, %v251
    %v253 = vshll.u32 2102212464, %v241
    %v254 = vshrl.u32 920167782, %v242
    %v255 = vor.u32 %v253, %v254
    %v256 = vshll.u32 920167782, %v241
    %v257 = vshrl.u32 1326507024, %v242
    %v258 = vor.u32 %v256, %v257
    %vm259 = vcmp.lt.s32.totalorder %v240, 1
    %vm260 = vcmp.lt.s32.totalorder %v240, 2
    %vm261 = vcmp.lt.s32.totalorder %v240, 3
    %vm262 = vcmp.lt.s32.totalorder %v240, 4
    %v263 = vsel %vm259, %v243, %v246
    %v264 = vsel %vm262, %v252, 2102212464
    %v265 = vsel %vm261, %v249, %v264
    %v266 = vsel %vm260, %v263, %v265
    %v267 = vsel %vm259, %v246, %v249
    %v268 = vsel %vm262, %v255, 920167782
    %v269 = vsel %vm261, %v252, %v268
    %v270 = vsel %vm260, %v267, %v269
    %v271 = vsel %vm259, %v249, %v252
    %v272 = vsel %vm262, %v258, 1326507024
    %v273 = vsel %vm261, %v255, %v272
    %v274 = vsel %vm260, %v271, %v273
    %v275 = vshll.u32 %v235, 8
    %v276 = vand.u32 %v275, 65535
    %v277 = vshrl.u32 %v275, 16
    %v278 = vand.u32 %v274, 65535
    %v279 = vshrl.u32 %v274, 16
    %v280 = vmul.u32 %v276, %v278
    %v281 = vmul.u32 %v276, %v279
    %v282 = vmul.u32 %v277, %v278
    %v283 = vmul.u32 %v277, %v279
    %v284 = vshll.u32 %v281, 16
    %v285 = vshrl.u32 %v281, 16
    %v286 = vshll.u32 %v282, 16
    %v287 = vshrl.u32 %v282, 16
    %vm288 = vc.u32 %v280, %v284
    %v289 = vsel %vm288, 1, 0
    %v290 = vadd.s32 %v280, %v284
    %v291 = vadd.s32 %v283, %v289
    %vm292 = vc.u32 %v290, %v286
    %v293 = vsel %vm292, 1, 0
    %v294 = vadd.s32 %v290, %v286
    %v295 = vadd.s32 %v291, %v293
    %v296 = vadd.s32 %v295, %v285
    %v297 = vadd.s32 %v296, %v287
    %v298 = vand.u32 %v275, 65535
    %v299 = vshrl.u32 %v275, 16
    %v300 = vand.u32 %v270, 65535
    %v301 = vshrl.u32 %v270, 16
    %v302 = vmul.u32 %v298, %v300
    %v303 = vmul.u32 %v298, %v301
    %v304 = vmul.u32 %v299, %v300
    %v305 = vmul.u32 %v299, %v301
    %v306 = vshll.u32 %v303, 16
    %v307 = vshrl.u32 %v303, 16
    %v308 = vshll.u32 %v304, 16
    %v309 = vshrl.u32 %v304, 16
    %vm310 = vc.u32 %v302, %v306
    %v311 = vsel %vm310, 1, 0
    %v312 = vadd.s32 %v302, %v306
    %v313 = vadd.s32 %v305, %v311
    %vm314 = vc.u32 %v312, %v308
    %v315 = vsel %vm314, 1, 0
    %v316 = vadd.s32 %v312, %v308
    %v317 = vadd.s32 %v313, %v315
    %v318 = vadd.s32 %v317, %v307
    %v319 = vadd.s32 %v318, %v309
    %v320 = vmul.u32 %v275, %v266
    %v321 = vadd.s32 %v297, %v316
    %vm322 = vc.u32 %v297, %v316
    %v323 = vadd.s32 %v319, 1
    %v324 = vsel %vm322, %v323, %v319
    %v325 = vadd.s32 %v320, %v324
    %v326 = vadd.s32 %v325, 536870912
    %v327 = vshrl.u32 %v326, 30
    %v328 = vshll.u32 %v327, 30
    %v329 = vsub.s32 %v325, %v328
    %vm330 = vcmp.lt.s32.totalorder %v329, 0
    %v331 = vsub.s32 0, %v329
    %v332 = vsel %vm330, %v331, %v329
    %v333 = vclz %v332
    %v334 = vsub.s32 %v333, 2
    %vm335 = vcmp.gt.s32.totalorder 0, %v334
    %v336 = vsel %vm335, 0, %v334
    %v337 = vsub.s32 32, %v336
    %v338 = vshll.u32 %v329, %v336
    %v339 = vshrl.u32 %v321, %v337
    %v340 = vor.u32 %v338, %v339
    %v341 = vsub.s32 4294967266, %v336
    %v342 = vadd.s32 %v341, 127
    %v343 = vshll.u32 %v342, 23
    %v344 = vor.u32 4788187, %v343
    %v345 = vand.u32 2147483647, %v344
    %v347 = vcvt.s32.f32 %v340
    %v348 = vmul.f32 %v347, %v345
    %v349 = vxor.u32 %v348, 2147483648
    %v350 = vsel %vm229, %v349, %v348
    %v351 = vsub.s32 4, %v327
    %v352 = vsel %vm229, %v351, %v327
    %v353 = vsel %vm228, %v70, %v350
    %v354 = vsel %vm228, 0, %v352
    %v355 = vmul.f32 %v353, %v353
    %v356 = vmul.f32 %v355, -0.001358992
    %v357 = vadd.f32 %v356, 0.041655596
    %v358 = vmul.f32 %v355, %v357
    %v359 = vadd.f32 %v358, -0.4999988
    %v360 = vmul.f32 %v355, %v359
    %v361 = vadd.f32 1.0, %v360
    %v362 = vmul.f32 %v353, %v353
    %v363 = vmul.f32 %v362, -0.00019511016
    %v364 = vadd.f32 %v363, 0.008332121
    %v365 = vmul.f32 %v362, %v364
    %v366 = vadd.f32 %v365, -0.16666654
    %v367 = vmul.f32 %v362, %v366
    %v368 = vadd.f32 %v367, 1.0
    %v369 = vmul.f32 %v368, %v353
    %vm370 = vweird.f32 %v70
    %v371 = vand.u32 %v354, 3
    %vm372 = vcmp.lt.s32.totalorder %v371, 2
    %vm373 = vcmp.eq.s32.totalorder %v371, 0
    %v374 = vxor.u32 %v369, 2147483648
    %v375 = vsel %vm373, %v361, %v374
    %vm376 = vcmp.eq.s32.totalorder %v371, 2
    %v377 = vxor.u32 %v361, 2147483648
    %v378 = vsel %vm376, %v377, %v369
    %v379 = vsel %vm372, %v375, %v378
    %v380 = vsel %vm370, nan, %v379
    %v381 = vpack.c.bf16 %v380, %v380
    %v382 = vld [vmem:[%s2] sm:$0xf]
    %v383 = vld [vmem:[%s2 + $0x4] sm:$0xf]
    %v384 = vld [vmem:[#allocation2] sm:$0xf]
    %v385 = vld [vmem:[#allocation2 + $0x4] sm:$0xf]
    %v388 = vunpack.c.l.b16 %v384
    %v389 = vunpack.c.l.b16 %v385
    %v390 = vpack.c.b16 %v389, %v388
    %vm392 = vcmask 130048
    %v394 = vsel %vm392, %v381, 0
    %396 = vmatpush.bf16.msra.mxu0 0
    %397 = vmatpush.bf16.msra.mxu0 0
    %398 = vmatpush.bf16.msra.mxu0 0
    %399 = vmatpush.bf16.msra.mxu0 0
    %400 = vmatpush.bf16.msra.mxu0 0
    %401 = vmatpush.bf16.msra.mxu0 0
    %402 = vmatpush.bf16.msra.mxu0 0
    %403 = vmatpush.bf16.msra.mxu0 %v390
    %404 = vmatmul.bf16.gmra.mxu0 %v394
    %v405 = vpop.f32.mrf.mxu0
    %v406 = vadd.f32 0.0, %v405
    %v407 = vpop.f32.mrf.mxu0
    %408 = vdwg.mxu0
    %v411 = vunpack.c.l.b16 %v382
    %v412 = vunpack.c.l.b16 %v383
    %v413 = vpack.c.b16 %v412, %v411
    %v416 = vsel %vm392, %v226, 0
    %418 = vmatpush.bf16.msra.mxu0 0
    %419 = vmatpush.bf16.msra.mxu0 0
    %420 = vmatpush.bf16.msra.mxu0 0
    %421 = vmatpush.bf16.msra.mxu0 0
    %422 = vmatpush.bf16.msra.mxu0 0
    %423 = vmatpush.bf16.msra.mxu0 0
    %424 = vmatpush.bf16.msra.mxu0 0
    %425 = vmatpush.bf16.msra.mxu0 %v413
    %426 = vmatmul.bf16.gmra.mxu0 %v416
    %v427 = vpop.f32.mrf.mxu0
    %v428 = vadd.f32 %v406, %v427
    %v429 = vpop.f32.mrf.mxu0
    %430 = vdwg.mxu0
    %v431 = vld [vmem:[%s4] sm:$0x1]
    %v433 = vperm.slane %v431, 0
    %v435 = vadd.f32 %v428, %v433
    %v436 = vxor.u32 %v435, 2147483648
    %v437 = vmul.f32 %v436, 1.442695
    %v438 = vpow.pop %v437
    %v439 = vadd.f32 %v438, 1.0
    %v440 = vrcp.pop %v439
    %v441 = vmul.f32 %v439, %v440
    %v442 = vsub.f32 1.0, %v441
    %v443 = vmul.f32 %v440, %v442
    %v444 = vadd.f32 %v440, %v443
    %vm445 = vweird.f32 %v439
    %vm446 = vweird.f32 %v440
    %vm447 = vmor %vm445, %vm446
    %v448 = vsel %vm447, %v440, %v444
    %v449 = vand.u32 2147483647, %v439
    %vm450 = vcmp.eq.f32.partialorder %v449, 8.507059e+37
    %v451 = vand.u32 %v439, 2147483648
    %v452 = vor.u32 1.1754944e-38, %v451
    %v453 = vsel %vm450, %v452, %v448
    %v454 = vmul.f32 1.0, %v453
    %v455 = vmul.f32 %v435, %v454
    %v456 = vpack.c.bf16 %v455, %v455
    %v457 = vld [vmem:[#allocation5] sm:$0xf]
    %v458 = vld [vmem:[#allocation5 + $0x4] sm:$0xf]
    %v459 = vld [vmem:[#allocation5 + $0x8] sm:$0xf]
    %v460 = vld [vmem:[#allocation5 + $0xc] sm:$0xf]
    %v461 = vld [vmem:[#allocation5 + $0x10] sm:$0xf]
    %v462 = vld [vmem:[#allocation5 + $0x14] sm:$0xf]
    %v463 = vld [vmem:[#allocation5 + $0x18] sm:$0xf]
    %v464 = vld [vmem:[#allocation5 + $0x1c] sm:$0xf]
    %v465 = vld [vmem:[#allocation5 + $0x20] sm:$0xf]
    %v466 = vld [vmem:[#allocation5 + $0x24] sm:$0xf]
    %v467 = vld [vmem:[#allocation5 + $0x28] sm:$0xf]
    %v468 = vld [vmem:[#allocation5 + $0x2c] sm:$0xf]
    %v469 = vld [vmem:[#allocation5 + $0x30] sm:$0xf]
    %v470 = vld [vmem:[#allocation5 + $0x34] sm:$0xf]
    %v471 = vld [vmem:[#allocation5 + $0x38] sm:$0xf]
    %v472 = vld [vmem:[#allocation5 + $0x3c] sm:$0xf]
    %v473 = vld [vmem:[%s6] sm:$0x1]
    %v475 = vperm.slane %v473, 0
    %v493 = vunpack.c.l.b16 %v457
    %v494 = vunpack.c.l.b16 %v458
    %v495 = vunpack.c.l.b16 %v459
    %v496 = vunpack.c.l.b16 %v460
    %v497 = vunpack.c.l.b16 %v461
    %v498 = vunpack.c.l.b16 %v462
    %v499 = vunpack.c.l.b16 %v463
    %v500 = vunpack.c.l.b16 %v464
    %v501 = vunpack.c.l.b16 %v465
    %v502 = vunpack.c.l.b16 %v466
    %v503 = vunpack.c.l.b16 %v467
    %v504 = vunpack.c.l.b16 %v468
    %v505 = vunpack.c.l.b16 %v469
    %v506 = vunpack.c.l.b16 %v470
    %v507 = vunpack.c.l.b16 %v471
    %v508 = vunpack.c.l.b16 %v472
    %v509 = vpack.c.b16 %v494, %v493
    %v510 = vpack.c.b16 %v496, %v495
    %v511 = vpack.c.b16 %v498, %v497
    %v512 = vpack.c.b16 %v500, %v499
    %v513 = vpack.c.b16 %v502, %v501
    %v514 = vpack.c.b16 %v504, %v503
    %v515 = vpack.c.b16 %v506, %v505
    %v516 = vpack.c.b16 %v508, %v507
    %525 = vmatpush.bf16.msra.mxu0 %v516
    %526 = vmatpush.bf16.msra.mxu0 %v515
    %527 = vmatpush.bf16.msra.mxu0 %v514
    %528 = vmatpush.bf16.msra.mxu0 %v513
    %529 = vmatpush.bf16.msra.mxu0 %v512
    %530 = vmatpush.bf16.msra.mxu0 %v511
    %531 = vmatpush.bf16.msra.mxu0 %v510
    %532 = vmatpush.bf16.msra.mxu0 %v509
    %533 = vmatmul.bf16.gmra.mxu0 %v456
    %v534 = vpop.f32.mrf.mxu0
    %v535 = vadd.f32 %v475, %v534
    %v536 = vpop.f32.mrf.mxu0
    %537 = vdwg.mxu0
    %538 = vst [vmem:[#allocation7] sm:$0xff] %v535
    // Predicated region
    $region38: #{tpu_custom_call.1} parent=1 // pred_check
      _
    $region39: #{tpu_custom_call.1} parent=1 // pred_check_branch
      %540 = sbr.rel (0) target = $region41
    $region40: #{tpu_custom_call.1} parent=1 // pred_region
      %542 = vsyncadd [#allocation4], 0
      %s544 = sshll.u32 [#allocation7], 4
      %s545 = int_to_ptr.vmem [resolvable:$true] %s544
      %s546 = sshll.u32 %s7, 4
      %s547 = int_to_ptr.hbm [resolvable:$true] %s546
      %549 = dma.vmem_to_hbm [thread:$0]  %s545, 128, %s547, [#allocation4]
    $region41: #{tpu_custom_call.1} parent=1 // pred_fallthru
      _
    // Predicated region
    $region42: #{tpu_custom_call.1} parent=1 // pred_check
      _
    $region43: #{tpu_custom_call.1} parent=1 // pred_check_branch
      %551 = sbr.rel (0) target = $region45
    $region44: #{tpu_custom_call.1} parent=1 // pred_region
      %553 = dma.done [#allocation4], 128
    $region45: #{tpu_custom_call.1} parent=1 // pred_fallthru
      _
    %554 = vsyncpa [#allocation3], 1
    %555 = vsyncpa [#allocation6], 1
    %556 = vsyncpa [#allocation4], 1

// kernel: tpu_custom_call.1
$region0: #{tpu_custom_call.1}
  #allocation0 [shape = 'u32[]', space=smem, size = 0x4, offset = 0x4, fixed_abs, tag = 'smem constant byte address 0x4 - core index']
  #allocation1 [shape = 'u32[72,128]{1,0:T(1,128)}', space=vmem, size = 0x9000, scoped, tag = 'internal scratch']
  %s0 = inlined_call_operand.vmem [shape: f32[8,1], index: 0, kind: input, shape index: {}]
  %s1 = inlined_call_operand.vmem [shape: f32[1,16], index: 1, kind: input, shape index: {}]
  %s2 = inlined_call_operand.vmem [shape: bf16[16,128], index: 2, kind: input, shape index: {}]
  %s3 = inlined_call_operand.hbm [shape: bf16[16,128], index: 3, kind: input, shape index: {}]
  %s4 = inlined_call_operand.vmem [shape: f32[1,128], index: 4, kind: input, shape index: {}]
  %s5 = inlined_call_operand.hbm [shape: bf16[128,128], index: 5, kind: input, shape index: {}]
  %s6 = inlined_call_operand.vmem [shape: f32[1,128], index: 6, kind: input, shape index: {}]
  %s7 = inlined_call_operand.hbm [shape: f32[8,128], index: 7, kind: output, shape index: {}]
  %s8 = sld [smem:[#allocation0]]
  $region46: #{tpu_custom_call.1} parent=0
    _
  %s10 = ssub.s32 1, %s8
  %s11 = scalar_select 0, %s10, %s8
  $region1: #{tpu_custom_call.1} parent=0
    #allocation2 [shape = 'u8[4096]{0}', space=vmem, size = 0x1000, scoped, tag = 'input window, operand 3, single buffered']
    #allocation3 [shape = 's32[1]{0}', space=sflag, size = 0x4, scoped, tag = 'scoped memory for tpu_custom_call.1']
    #allocation4 [shape = 's32[1]{0}', space=sflag, size = 0x4, scoped, tag = 'scoped memory for tpu_custom_call.1']
    #allocation5 [shape = 'u8[32768]{0}', space=vmem, size = 0x8000, scoped, tag = 'input window, operand 5, single buffered']
    #allocation6 [shape = 's32[1]{0}', space=sflag, size = 0x4, scoped, tag = 'scoped memory for tpu_custom_call.1']
    #allocation7 [shape = 'u8[4096]{0}', space=vmem, size = 0x1000, scoped, tag = 'output window, operand 0, single buffered']
    %12 = vsyncpa [#allocation3], 0
    %13 = vsyncpa [#allocation6], 0
    %14 = vsyncpa [#allocation4], 0
    // Predicated region
    $region2: #{tpu_custom_call.1} parent=1 // pred_check
      _
    $region3: #{tpu_custom_call.1} parent=1 // pred_check_branch
      %16 = sbr.rel (0) target = $region5
    $region4: #{tpu_custom_call.1} parent=1 // pred_region
      _
    $region5: #{tpu_custom_call.1} parent=1 // pred_fallthru
      _
    // Predicated region
    $region6: #{tpu_custom_call.1} parent=1 // pred_check
      _
    $region7: #{tpu_custom_call.1} parent=1 // pred_check_branch
      %18 = sbr.rel (0) target = $region9
    $region8: #{tpu_custom_call.1} parent=1 // pred_region
      _
    $region9: #{tpu_custom_call.1} parent=1 // pred_fallthru
      _
    // Predicated region
    $region10: #{tpu_custom_call.1} parent=1 // pred_check
      _
    $region11: #{tpu_custom_call.1} parent=1 // pred_check_branch
      %20 = sbr.rel (0) target = $region13
    $region12: #{tpu_custom_call.1} parent=1 // pred_region
      _
    $region13: #{tpu_custom_call.1} parent=1 // pred_fallthru
      _
    // Predicated region
    $region14: #{tpu_custom_call.1} parent=1 // pred_check
      _
    $region15: #{tpu_custom_call.1} parent=1 // pred_check_branch
      %22 = sbr.rel (0) target = $region17
    $region16: #{tpu_custom_call.1} parent=1 // pred_region
      %24 = vsyncadd [#allocation3], 0
      %s25 = sshll.u32 %s3, 4
      %s26 = int_to_ptr.hbm [resolvable:$true] %s25
      %s27 = sshll.u32 [#allocation2], 4
      %s28 = int_to_ptr.vmem [resolvable:$true] %s27
      %33 = dma.hbm_to_vmem [thread:$0]  %s26, 128, %s28, [#allocation3], 64, 64, 4
    $region17: #{tpu_custom_call.1} parent=1 // pred_fallthru
      _
    // Predicated region
    $region18: #{tpu_custom_call.1} parent=1 // pred_check
      _
    $region19: #{tpu_custom_call.1} parent=1 // pred_check_branch
      %35 = sbr.rel (0) target = $region21
    $region20: #{tpu_custom_call.1} parent=1 // pred_region
      _
    $region21: #{tpu_custom_call.1} parent=1 // pred_fallthru
      _
    // Predicated region
    $region22: #{tpu_custom_call.1} parent=1 // pred_check
      _
    $region23: #{tpu_custom_call.1} parent=1 // pred_check_branch
      %37 = sbr.rel (0) target = $region25
    $region24: #{tpu_custom_call.1} parent=1 // pred_region
      %39 = vsyncadd [#allocation6], 0
      %s40 = sshll.u32 %s5, 4
      %s41 = int_to_ptr.hbm [resolvable:$true] %s40
      %s42 = sshll.u32 [#allocation5], 4
      %s43 = int_to_ptr.vmem [resolvable:$true] %s42
      %48 = dma.hbm_to_vmem [thread:$0]  %s41, 1024, %s43, [#allocation6], 64, 64, 4
    $region25: #{tpu_custom_call.1} parent=1 // pred_fallthru
      _
    // Predicated region
    $region26: #{tpu_custom_call.1} parent=1 // pred_check
      _
    $region27: #{tpu_custom_call.1} parent=1 // pred_check_branch
      %50 = sbr.rel (0) target = $region29
    $region28: #{tpu_custom_call.1} parent=1 // pred_region
      _
    $region29: #{tpu_custom_call.1} parent=1 // pred_fallthru
      _
    // Predicated region
    $region30: #{tpu_custom_call.1} parent=1 // pred_check
      _
    $region31: #{tpu_custom_call.1} parent=1 // pred_check_branch
      %52 = sbr.rel (0) target = $region33
    $region32: #{tpu_custom_call.1} parent=1 // pred_region
      %54 = dma.done [#allocation3], 128
    $region33: #{tpu_custom_call.1} parent=1 // pred_fallthru
      _
    // Predicated region
    $region34: #{tpu_custom_call.1} parent=1 // pred_check
      _
    $region35: #{tpu_custom_call.1} parent=1 // pred_check_branch
      %56 = sbr.rel (0) target = $region37
    $region36: #{tpu_custom_call.1} parent=1 // pred_region
      %58 = dma.done [#allocation6], 1024
    $region37: #{tpu_custom_call.1} parent=1 // pred_fallthru
      _
    %v60 = vld [vmem:[%s0] sm:$0xff]
    %v61 = vld [vmem:[%s1] sm:$0x1]
    %63 = vset.pattern.permute.xlu0 0
    %64 = vperm.xlu0 %63, %v60
    %v65 = vpop.permute.xlu0 %64
    %v68 = vperm.slane %v61, 0
    %v70 = vmul.f32 %v65, %v68
    %v71 = vand.u32 2147483647, %v70
    %vm72 = vcmp.le.f32.partialorder %v71, 0.7853982
    %vm73 = vcmp.lt.s32.totalorder %v70, 0
    %v74 = vand.u32 %v70, 2139095040
    %v75 = vshrl.u32 %v74, 23
    %v76 = vsub.s32 %v75, 127
    %v77 = vand.u32 2147483647, %v70
    %v78 = vand.u32 %v77, 8388607
    %v79 = vor.u32 %v78, 8388608
    %v80 = vsub.s32 0, %v79
    %v81 = vadd.s32 %v76, 1
    %vm82 = vcmp.gt.s32.totalorder %v81, 0
    %v83 = vsel %vm82, %v81, 0
    %v84 = vshrl.u32 %v83, 5
    %v85 = vand.u32 %v83, 31
    %v86 = vsub.s32 32, %v85
    %v87 = vshrl.u32 683565275, %v86
    %v88 = vshll.u32 683565275, %v85
    %v89 = vshrl.u32 2475754826, %v86
    %v90 = vor.u32 %v88, %v89
    %v91 = vshll.u32 2475754826, %v85
    %v92 = vshrl.u32 2131351028, %v86
    %v93 = vor.u32 %v91, %v92
    %v94 = vshll.u32 2131351028, %v85
    %v95 = vshrl.u32 2102212464, %v86
    %v96 = vor.u32 %v94, %v95
    %v97 = vshll.u32 2102212464, %v85
    %v98 = vshrl.u32 920167782, %v86
    %v99 = vor.u32 %v97, %v98
    %v100 = vshll.u32 920167782, %v85
    %v101 = vshrl.u32 1326507024, %v86
    %v102 = vor.u32 %v100, %v101
    %vm103 = vcmp.lt.s32.totalorder %v84, 1
    %vm104 = vcmp.lt.s32.totalorder %v84, 2
    %vm105 = vcmp.lt.s32.totalorder %v84, 3
    %vm106 = vcmp.lt.s32.totalorder %v84, 4
    %v107 = vsel %vm103, %v87, %v90
    %v108 = vsel %vm106, %v96, 2102212464
    %v109 = vsel %vm105, %v93, %v108
    %v110 = vsel %vm104, %v107, %v109
    %v111 = vsel %vm103, %v90, %v93
    %v112 = vsel %vm106, %v99, 920167782
    %v113 = vsel %vm105, %v96, %v112
    %v114 = vsel %vm104, %v111, %v113
    %v115 = vsel %vm103, %v93, %v96
    %v116 = vsel %vm106, %v102, 1326507024
    %v117 = vsel %vm105, %v99, %v116
    %v118 = vsel %vm104, %v115, %v117
    %v119 = vshll.u32 %v79, 8
    %v120 = vand.u32 %v119, 65535
    %v121 = vshrl.u32 %v119, 16
    %v122 = vand.u32 %v118, 65535
    %v123 = vshrl.u32 %v118, 16
    %v124 = vmul.u32 %v120, %v122
    %v125 = vmul.u32 %v120, %v123
    %v126 = vmul.u32 %v121, %v122
    %v127 = vmul.u32 %v121, %v123
    %v128 = vshll.u32 %v125, 16
    %v129 = vshrl.u32 %v125, 16
    %v130 = vshll.u32 %v126, 16
    %v131 = vshrl.u32 %v126, 16
    %vm132 = vc.u32 %v124, %v128
    %v133 = vsel %vm132, 1, 0
    %v134 = vadd.s32 %v124, %v128
    %v135 = vadd.s32 %v127, %v133
    %vm136 = vc.u32 %v134, %v130
    %v137 = vsel %vm136, 1, 0
    %v138 = vadd.s32 %v134, %v130
    %v139 = vadd.s32 %v135, %v137
    %v140 = vadd.s32 %v139, %v129
    %v141 = vadd.s32 %v140, %v131
    %v142 = vand.u32 %v119, 65535
    %v143 = vshrl.u32 %v119, 16
    %v144 = vand.u32 %v114, 65535
    %v145 = vshrl.u32 %v114, 16
    %v146 = vmul.u32 %v142, %v144
    %v147 = vmul.u32 %v142, %v145
    %v148 = vmul.u32 %v143, %v144
    %v149 = vmul.u32 %v143, %v145
    %v150 = vshll.u32 %v147, 16
    %v151 = vshrl.u32 %v147, 16
    %v152 = vshll.u32 %v148, 16
    %v153 = vshrl.u32 %v148, 16
    %vm154 = vc.u32 %v146, %v150
    %v155 = vsel %vm154, 1, 0
    %v156 = vadd.s32 %v146, %v150
    %v157 = vadd.s32 %v149, %v155
    %vm158 = vc.u32 %v156, %v152
    %v159 = vsel %vm158, 1, 0
    %v160 = vadd.s32 %v156, %v152
    %v161 = vadd.s32 %v157, %v159
    %v162 = vadd.s32 %v161, %v151
    %v163 = vadd.s32 %v162, %v153
    %v164 = vmul.u32 %v119, %v110
    %v165 = vadd.s32 %v141, %v160
    %vm166 = vc.u32 %v141, %v160
    %v167 = vadd.s32 %v163, 1
    %v168 = vsel %vm166, %v167, %v163
    %v169 = vadd.s32 %v164, %v168
    %v170 = vadd.s32 %v169, 536870912
    %v171 = vshrl.u32 %v170, 30
    %v172 = vshll.u32 %v171, 30
    %v173 = vsub.s32 %v169, %v172
    %vm174 = vcmp.lt.s32.totalorder %v173, 0
    %v175 = vsub.s32 0, %v173
    %v176 = vsel %vm174, %v175, %v173
    %v177 = vclz %v176
    %v178 = vsub.s32 %v177, 2
    %vm179 = vcmp.gt.s32.totalorder 0, %v178
    %v180 = vsel %vm179, 0, %v178
    %v181 = vsub.s32 32, %v180
    %v182 = vshll.u32 %v173, %v180
    %v183 = vshrl.u32 %v165, %v181
    %v184 = vor.u32 %v182, %v183
    %v185 = vsub.s32 4294967266, %v180
    %v186 = vadd.s32 %v185, 127
    %v187 = vshll.u32 %v186, 23
    %v188 = vor.u32 4788187, %v187
    %v189 = vand.u32 2147483647, %v188
    %v191 = vcvt.s32.f32 %v184
    %v192 = vmul.f32 %v191, %v189
    %v193 = vxor.u32 %v192, 2147483648
    %v194 = vsel %vm73, %v193, %v192
    %v195 = vsub.s32 4, %v171
    %v196 = vsel %vm73, %v195, %v171
    %v197 = vsel %vm72, %v70, %v194
    %v198 = vsel %vm72, 0, %v196
    %v199 = vmul.f32 %v197, %v197
    %v200 = vmul.f32 %v199, -0.001358992
    %v201 = vadd.f32 %v200, 0.041655596
    %v202 = vmul.f32 %v199, %v201
    %v203 = vadd.f32 %v202, -0.4999988
    %v204 = vmul.f32 %v199, %v203
    %v205 = vadd.f32 1.0, %v204
    %v206 = vmul.f32 %v197, %v197
    %v207 = vmul.f32 %v206, -0.00019511016
    %v208 = vadd.f32 %v207, 0.008332121
    %v209 = vmul.f32 %v206, %v208
    %v210 = vadd.f32 %v209, -0.16666654
    %v211 = vmul.f32 %v206, %v210
    %v212 = vadd.f32 %v211, 1.0
    %v213 = vmul.f32 %v212, %v197
    %vm214 = vweird.f32 %v70
    %v215 = vadd.s32 %v198, 3
    %v216 = vand.u32 %v215, 3
    %vm217 = vcmp.lt.s32.totalorder %v216, 2
    %vm218 = vcmp.eq.s32.totalorder %v216, 0
    %v219 = vxor.u32 %v213, 2147483648
    %v220 = vsel %vm218, %v205, %v219
    %vm221 = vcmp.eq.s32.totalorder %v216, 2
    %v222 = vxor.u32 %v205, 2147483648
    %v223 = vsel %vm221, %v222, %v213
    %v224 = vsel %vm217, %v220, %v223
    %v225 = vsel %vm214, nan, %v224
    %v226 = vpack.c.bf16 %v225, %v225
    %v227 = vand.u32 2147483647, %v70
    %vm228 = vcmp.le.f32.partialorder %v227, 0.7853982
    %vm229 = vcmp.lt.s32.totalorder %v70, 0
    %v230 = vand.u32 %v70, 2139095040
    %v231 = vshrl.u32 %v230, 23
    %v232 = vsub.s32 %v231, 127
    %v233 = vand.u32 2147483647, %v70
    %v234 = vand.u32 %v233, 8388607
    %v235 = vor.u32 %v234, 8388608
    %v236 = vsub.s32 0, %v235
    %v237 = vadd.s32 %v232, 1
    %vm238 = vcmp.gt.s32.totalorder %v237, 0
    %v239 = vsel %vm238, %v237, 0
    %v240 = vshrl.u32 %v239, 5
    %v241 = vand.u32 %v239, 31
    %v242 = vsub.s32 32, %v241
    %v243 = vshrl.u32 683565275, %v242
    %v244 = vshll.u32 683565275, %v241
    %v245 = vshrl.u32 2475754826, %v242
    %v246 = vor.u32 %v244, %v245
    %v247 = vshll.u32 2475754826, %v241
    %v248 = vshrl.u32 2131351028, %v242
    %v249 = vor.u32 %v247, %v248
    %v250 = vshll.u32 2131351028, %v241
    %v251 = vshrl.u32 2102212464, %v242
    %v252 = vor.u32 %v250, %v251
    %v253 = vshll.u32 2102212464, %v241
    %v254 = vshrl.u32 920167782, %v242
    %v255 = vor.u32 %v253, %v254
    %v256 = vshll.u32 920167782, %v241
    %v257 = vshrl.u32 1326507024, %v242
    %v258 = vor.u32 %v256, %v257
    %vm259 = vcmp.lt.s32.totalorder %v240, 1
    %vm260 = vcmp.lt.s32.totalorder %v240, 2
    %vm261 = vcmp.lt.s32.totalorder %v240, 3
    %vm262 = vcmp.lt.s32.totalorder %v240, 4
    %v263 = vsel %vm259, %v243, %v246
    %v264 = vsel %vm262, %v252, 2102212464
    %v265 = vsel %vm261, %v249, %v264
    %v266 = vsel %vm260, %v263, %v265
    %v267 = vsel %vm259, %v246, %v249
    %v268 = vsel %vm262, %v255, 920167782
    %v269 = vsel %vm261, %v252, %v268
    %v270 = vsel %vm260, %v267, %v269
    %v271 = vsel %vm259, %v249, %v252
    %v272 = vsel %vm262, %v258, 1326507024
    %v273 = vsel %vm261, %v255, %v272
    %v274 = vsel %vm260, %v271, %v273
    %v275 = vshll.u32 %v235, 8
    %v276 = vand.u32 %v275, 65535
    %v277 = vshrl.u32 %v275, 16
    %v278 = vand.u32 %v274, 65535
    %v279 = vshrl.u32 %v274, 16
    %v280 = vmul.u32 %v276, %v278
    %v281 = vmul.u32 %v276, %v279
    %v282 = vmul.u32 %v277, %v278
    %v283 = vmul.u32 %v277, %v279
    %v284 = vshll.u32 %v281, 16
    %v285 = vshrl.u32 %v281, 16
    %v286 = vshll.u32 %v282, 16
    %v287 = vshrl.u32 %v282, 16
    %vm288 = vc.u32 %v280, %v284
    %v289 = vsel %vm288, 1, 0
    %v290 = vadd.s32 %v280, %v284
    %v291 = vadd.s32 %v283, %v289
    %vm292 = vc.u32 %v290, %v286
    %v293 = vsel %vm292, 1, 0
    %v294 = vadd.s32 %v290, %v286
    %v295 = vadd.s32 %v291, %v293
    %v296 = vadd.s32 %v295, %v285
    %v297 = vadd.s32 %v296, %v287
    %v298 = vand.u32 %v275, 65535
    %v299 = vshrl.u32 %v275, 16
    %v300 = vand.u32 %v270, 65535
    %v301 = vshrl.u32 %v270, 16
    %v302 = vmul.u32 %v298, %v300
    %v303 = vmul.u32 %v298, %v301
    %v304 = vmul.u32 %v299, %v300
    %v305 = vmul.u32 %v299, %v301
    %v306 = vshll.u32 %v303, 16
    %v307 = vshrl.u32 %v303, 16
    %v308 = vshll.u32 %v304, 16
    %v309 = vshrl.u32 %v304, 16
    %vm310 = vc.u32 %v302, %v306
    %v311 = vsel %vm310, 1, 0
    %v312 = vadd.s32 %v302, %v306
    %v313 = vadd.s32 %v305, %v311
    %vm314 = vc.u32 %v312, %v308
    %v315 = vsel %vm314, 1, 0
    %v316 = vadd.s32 %v312, %v308
    %v317 = vadd.s32 %v313, %v315
    %v318 = vadd.s32 %v317, %v307
    %v319 = vadd.s32 %v318, %v309
    %v320 = vmul.u32 %v275, %v266
    %v321 = vadd.s32 %v297, %v316
    %vm322 = vc.u32 %v297, %v316
    %v323 = vadd.s32 %v319, 1
    %v324 = vsel %vm322, %v323, %v319
    %v325 = vadd.s32 %v320, %v324
    %v326 = vadd.s32 %v325, 536870912
    %v327 = vshrl.u32 %v326, 30
    %v328 = vshll.u32 %v327, 30
    %v329 = vsub.s32 %v325, %v328
    %vm330 = vcmp.lt.s32.totalorder %v329, 0
    %v331 = vsub.s32 0, %v329
    %v332 = vsel %vm330, %v331, %v329
    %v333 = vclz %v332
    %v334 = vsub.s32 %v333, 2
    %vm335 = vcmp.gt.s32.totalorder 0, %v334
    %v336 = vsel %vm335, 0, %v334
    %v337 = vsub.s32 32, %v336
    %v338 = vshll.u32 %v329, %v336
    %v339 = vshrl.u32 %v321, %v337
    %v340 = vor.u32 %v338, %v339
    %v341 = vsub.s32 4294967266, %v336
    %v342 = vadd.s32 %v341, 127
    %v343 = vshll.u32 %v342, 23
    %v344 = vor.u32 4788187, %v343
    %v345 = vand.u32 2147483647, %v344
    %v347 = vcvt.s32.f32 %v340
    %v348 = vmul.f32 %v347, %v345
    %v349 = vxor.u32 %v348, 2147483648
    %v350 = vsel %vm229, %v349, %v348
    %v351 = vsub.s32 4, %v327
    %v352 = vsel %vm229, %v351, %v327
    %v353 = vsel %vm228, %v70, %v350
    %v354 = vsel %vm228, 0, %v352
    %v355 = vmul.f32 %v353, %v353
    %v356 = vmul.f32 %v355, -0.001358992
    %v357 = vadd.f32 %v356, 0.041655596
    %v358 = vmul.f32 %v355, %v357
    %v359 = vadd.f32 %v358, -0.4999988
    %v360 = vmul.f32 %v355, %v359
    %v361 = vadd.f32 1.0, %v360
    %v362 = vmul.f32 %v353, %v353
    %v363 = vmul.f32 %v362, -0.00019511016
    %v364 = vadd.f32 %v363, 0.008332121
    %v365 = vmul.f32 %v362, %v364
    %v366 = vadd.f32 %v365, -0.16666654
    %v367 = vmul.f32 %v362, %v366
    %v368 = vadd.f32 %v367, 1.0
    %v369 = vmul.f32 %v368, %v353
    %vm370 = vweird.f32 %v70
    %v371 = vand.u32 %v354, 3
    %vm372 = vcmp.lt.s32.totalorder %v371, 2
    %vm373 = vcmp.eq.s32.totalorder %v371, 0
    %v374 = vxor.u32 %v369, 2147483648
    %v375 = vsel %vm373, %v361, %v374
    %vm376 = vcmp.eq.s32.totalorder %v371, 2
    %v377 = vxor.u32 %v361, 2147483648
    %v378 = vsel %vm376, %v377, %v369
    %v379 = vsel %vm372, %v375, %v378
    %v380 = vsel %vm370, nan, %v379
    %v381 = vpack.c.bf16 %v380, %v380
    %v382 = vld [vmem:[%s2] sm:$0xf]
    %v383 = vld [vmem:[%s2 + $0x4] sm:$0xf]
    %v384 = vld [vmem:[#allocation2] sm:$0xf]
    %v385 = vld [vmem:[#allocation2 + $0x4] sm:$0xf]
    %v388 = vunpack.c.l.b16 %v384
    %v389 = vunpack.c.l.b16 %v385
    %v390 = vpack.c.b16 %v389, %v388
    %vm392 = vcmask 130048
    %v394 = vsel %vm392, %v381, 0
    %396 = vmatpush.bf16.msra.mxu0 0
    %397 = vmatpush.bf16.msra.mxu0 0
    %398 = vmatpush.bf16.msra.mxu0 0
    %399 = vmatpush.bf16.msra.mxu0 0
    %400 = vmatpush.bf16.msra.mxu0 0
    %401 = vmatpush.bf16.msra.mxu0 0
    %402 = vmatpush.bf16.msra.mxu0 0
    %403 = vmatpush.bf16.msra.mxu0 %v390
    %404 = vmatmul.bf16.gmra.mxu0 %v394
    %v405 = vpop.f32.mrf.mxu0
    %v406 = vadd.f32 0.0, %v405
    %v407 = vpop.f32.mrf.mxu0
    %408 = vdwg.mxu0
    %v411 = vunpack.c.l.b16 %v382
    %v412 = vunpack.c.l.b16 %v383
    %v413 = vpack.c.b16 %v412, %v411
    %v416 = vsel %vm392, %v226, 0
    %418 = vmatpush.bf16.msra.mxu0 0
    %419 = vmatpush.bf16.msra.mxu0 0
    %420 = vmatpush.bf16.msra.mxu0 0
    %421 = vmatpush.bf16.msra.mxu0 0
    %422 = vmatpush.bf16.msra.mxu0 0
    %423 = vmatpush.bf16.msra.mxu0 0
    %424 = vmatpush.bf16.msra.mxu0 0
    %425 = vmatpush.bf16.msra.mxu0 %v413
    %426 = vmatmul.bf16.gmra.mxu0 %v416
    %v427 = vpop.f32.mrf.mxu0
    %v428 = vadd.f32 %v406, %v427
    %v429 = vpop.f32.mrf.mxu0
    %430 = vdwg.mxu0
    %v431 = vld [vmem:[%s4] sm:$0x1]
    %v433 = vperm.slane %v431, 0
    %v435 = vadd.f32 %v428, %v433
    %v436 = vxor.u32 %v435, 2147483648
    %v437 = vmul.f32 %v436, 1.442695
    %v438 = vpow.pop %v437
    %v439 = vadd.f32 %v438, 1.0
    %v440 = vrcp.pop %v439
    %v441 = vmul.f32 %v439, %v440
    %v442 = vsub.f32 1.0, %v441
    %v443 = vmul.f32 %v440, %v442
    %v444 = vadd.f32 %v440, %v443
    %vm445 = vweird.f32 %v439
    %vm446 = vweird.f32 %v440
    %vm447 = vmor %vm445, %vm446
    %v448 = vsel %vm447, %v440, %v444
    %v449 = vand.u32 2147483647, %v439
    %vm450 = vcmp.eq.f32.partialorder %v449, 8.507059e+37
    %v451 = vand.u32 %v439, 2147483648
    %v452 = vor.u32 1.1754944e-38, %v451
    %v453 = vsel %vm450, %v452, %v448
    %v454 = vmul.f32 1.0, %v453
    %v455 = vmul.f32 %v435, %v454
    %v456 = vpack.c.bf16 %v455, %v455
    %v457 = vld [vmem:[#allocation5] sm:$0xf]
    %v458 = vld [vmem:[#allocation5 + $0x4] sm:$0xf]
    %v459 = vld [vmem:[#allocation5 + $0x8] sm:$0xf]
    %v460 = vld [vmem:[#allocation5 + $0xc] sm:$0xf]
    %v461 = vld [vmem:[#allocation5 + $0x10] sm:$0xf]
    %v462 = vld [vmem:[#allocation5 + $0x14] sm:$0xf]
    %v463 = vld [vmem:[#allocation5 + $0x18] sm:$0xf]
    %v464 = vld [vmem:[#allocation5 + $0x1c] sm:$0xf]
    %v465 = vld [vmem:[#allocation5 + $0x20] sm:$0xf]
    %v466 = vld [vmem:[#allocation5 + $0x24] sm:$0xf]
    %v467 = vld [vmem:[#allocation5 + $0x28] sm:$0xf]
    %v468 = vld [vmem:[#allocation5 + $0x2c] sm:$0xf]
    %v469 = vld [vmem:[#allocation5 + $0x30] sm:$0xf]
    %v470 = vld [vmem:[#allocation5 + $0x34] sm:$0xf]
    %v471 = vld [vmem:[#allocation5 + $0x38] sm:$0xf]
    %v472 = vld [vmem:[#allocation5 + $0x3c] sm:$0xf]
    %v473 = vld [vmem:[%s6] sm:$0x1]
    %v475 = vperm.slane %v473, 0
    %v493 = vunpack.c.l.b16 %v457
    %v494 = vunpack.c.l.b16 %v458
    %v495 = vunpack.c.l.b16 %v459
    %v496 = vunpack.c.l.b16 %v460
    %v497 = vunpack.c.l.b16 %v461
    %v498 = vunpack.c.l.b16 %v462
    %v499 = vunpack.c.l.b16 %v463
    %v500 = vunpack.c.l.b16 %v464
    %v501 = vunpack.c.l.b16 %v465
    %v502 = vunpack.c.l.b16 %v466
    %v503 = vunpack.c.l.b16 %v467
    %v504 = vunpack.c.l.b16 %v468
    %v505 = vunpack.c.l.b16 %v469
    %v506 = vunpack.c.l.b16 %v470
    %v507 = vunpack.c.l.b16 %v471
    %v508 = vunpack.c.l.b16 %v472
    %v509 = vpack.c.b16 %v494, %v493
    %v510 = vpack.c.b16 %v496, %v495
    %v511 = vpack.c.b16 %v498, %v497
    %v512 = vpack.c.b16 %v500, %v499
    %v513 = vpack.c.b16 %v502, %v501
    %v514 = vpack.c.b16 %v504, %v503
    %v515 = vpack.c.b16 %v506, %v505
    %v516 = vpack.c.b16 %v508, %v507
    %525 = vmatpush.bf16.msra.mxu0 %v516
    %526 = vmatpush.bf16.msra.mxu0 %v515
    %527 = vmatpush.bf16.msra.mxu0 %v514
    %528 = vmatpush.bf16.msra.mxu0 %v513
    %529 = vmatpush.bf16.msra.mxu0 %v512
    %530 = vmatpush.bf16.msra.mxu0 %v511
    %531 = vmatpush.bf16.msra.mxu0 %v510
    %532 = vmatpush.bf16.msra.mxu0 %v509
    %533 = vmatmul.bf16.gmra.mxu0 %v456
    %v534 = vpop.f32.mrf.mxu0
    %v535 = vadd.f32 %v475, %v534
    %v536 = vpop.f32.mrf.mxu0
    %537 = vdwg.mxu0
    %538 = vst [vmem:[#allocation7] sm:$0xff] %v535
    // Predicated region
    $region38: #{tpu_custom_call.1} parent=1 // pred_check
      _
    $region39: #{tpu_custom_call.1} parent=1 // pred_check_branch
      %540 = sbr.rel (0) target = $region41
    $region40: #{tpu_custom_call.1} parent=1 // pred_region
      %542 = vsyncadd [#allocation4], 0
      %s544 = sshll.u32 [#allocation7], 4
      %s545 = int_to_ptr.vmem [resolvable:$true] %s544
      %s546 = sshll.u32 %s7, 4
      %s547 = int_to_ptr.hbm [resolvable:$true] %s546
      %549 = dma.vmem_to_hbm [thread:$0]  %s545, 128, %s547, [#allocation4]
    $region41: #{tpu_custom_call.1} parent=1 // pred_fallthru
      _
    // Predicated region
    $region42: #{tpu_custom_call.1} parent=1 // pred_check
      _
    $region43: #{tpu_custom_call.1} parent=1 // pred_check_branch
      %551 = sbr.rel (0) target = $region45
    $region44: #{tpu_custom_call.1} parent=1 // pred_region
      %553 = dma.done [#allocation4], 128
    $region45: #{tpu_custom_call.1} parent=1 // pred_fallthru
      _
    %554 = vsyncpa [#allocation3], 1
    %555 = vsyncpa [#allocation6], 1
    %556 = vsyncpa [#allocation4], 1

</llo_original>
